<compile_context>
chip_gen: v7x
topology: tpu7x:2x2x1
jax: 0.10.0
libtpu: 0.0.40
codegen_flags: <defaults>
</compile_context>

<pallas_src>
import functools
import math
from typing import NamedTuple

import jax
import jax.numpy as jnp
from jax.experimental import pallas as pl
from jax.experimental.pallas import tpu as pltpu


def _round_up(x: int, m: int) -> int:
    return ((x + m - 1) // m) * m


def _device_kind() -> str:
    try:
        return jax.devices()[0].device_kind.lower()
    except Exception:
        return ""


# --------------------------------------------------------------------------
# Kernel
# --------------------------------------------------------------------------
def _mlp_fused_kernel(x_ref, *refs, num_layers: int, widths: tuple):
    """refs = (w0, b0, ..., w_{L-1}, b_{L-1}, out, hbuf0, hbuf1).

    widths[i] = padded feature width at the input of layer i (widths[L] = out).
    Hidden activations ping-pong between two VMEM scratch slabs so at most two
    activation slabs are live regardless of network depth.
    """
    out_ref = refs[2 * num_layers]
    h_bufs = (refs[2 * num_layers + 1], refs[2 * num_layers + 2])

    h = x_ref[...]                                       # f32 (tm, widths[0])
    for i in range(num_layers):
        w_ref = refs[2 * i]
        b_ref = refs[2 * i + 1]
        # MXU operands in the weights' dtype (bf16 by default), f32 accumulate.
        acc = jnp.dot(h.astype(w_ref.dtype), w_ref[...],
                      preferred_element_type=jnp.float32)
        acc = acc + b_ref[...]                           # bias add in f32
        if i < num_layers - 1:
            buf = h_bufs[i % 2]
            buf[:, :widths[i + 1]] = jnp.tanh(acc)       # tanh in f32 (v5e-safe)
            h = buf[:, :widths[i + 1]]
        else:
            out_ref[...] = acc.astype(out_ref.dtype)     # no output activation


# --------------------------------------------------------------------------
# Parameter preparation (done ONCE, hoisted out of the forward path)
# --------------------------------------------------------------------------
class PreparedMlpParams(NamedTuple):
    flat: tuple          # (w0, b0, w1, b1, ...) padded arrays
    padded_sizes: tuple  # padded feature widths (d0, d1, ..., dL)
    in_features: int
    out_features: int


def prepare_mlp_params(params, param_dtype=jnp.bfloat16) -> PreparedMlpParams:
    """Zero-pad weights/biases to (8,128)-friendly shapes and cast weights to
    the MXU operand dtype.  Padded rows/cols are zero, so padded lanes stay
    exactly 0 through every layer (0 @ W = 0, bias 0, tanh(0) = 0)."""
    sizes = [params[0][0].shape[0]] + [w.shape[1] for (w, _) in params]
    padded = [_round_up(s, 128) for s in sizes]
    flat = []
    for i, (w, b) in enumerate(params):
        k, n = w.shape
        w_pad = jnp.zeros((padded[i], padded[i + 1]), param_dtype)
        w_pad = w_pad.at[:k, :n].set(w.astype(param_dtype))
        b_pad = jnp.zeros((1, padded[i + 1]), jnp.float32)
        b_pad = b_pad.at[0, :n].set(b.astype(jnp.float32))
        flat.extend([w_pad, b_pad])
    return PreparedMlpParams(tuple(flat), tuple(padded), sizes[0], sizes[-1])


# --------------------------------------------------------------------------
# pallas_call builder + forward
# --------------------------------------------------------------------------
def _choose_tm(batch: int, dual_core: bool) -> int:
    padded_b = _round_up(batch, 8)
    # v7x (2 TCs): smaller tiles -> >=2 grid programs to shard across cores.
    # v5e/v6e (1 TC): grid is a serial loop -> largest sane tile.
    cap = 128 if dual_core else 512
    return min(cap, padded_b)


def _build_call(num_layers, padded, tm, grid, batch, param_bytes,
                single_buffer_params, vmem_limit):
    widths = tuple(padded)
    max_hidden = max(padded[1:-1]) if num_layers > 1 else 128

    # Weights/biases have a constant index_map -> fetched once; single-buffer
    # them so they do not occupy 2x their size in VMEM.
    param_mode = {"pipeline_mode": pl.Buffered(1)} if single_buffer_params else {}

    in_specs = [pl.BlockSpec((tm, padded[0]), lambda i: (i, 0))]
    for li in range(num_layers):
        in_specs.append(pl.BlockSpec((padded[li], padded[li + 1]),
                                     lambda i: (0, 0), **param_mode))
        in_specs.append(pl.BlockSpec((1, padded[li + 1]),
                                     lambda i: (0, 0), **param_mode))

    # Advisory cost estimate for XLA's scheduler.
    rows = grid[0] * tm
    flops = sum(2 * rows * padded[i] * padded[i + 1] for i in range(num_layers))
    transcendentals = sum(rows * padded[i + 1] for i in range(num_layers - 1))
    bytes_accessed = rows * (padded[0] + padded[-1]) * 4 + param_bytes

    kernel = functools.partial(_mlp_fused_kernel,
                               num_layers=num_layers, widths=widths)
    return pl.pallas_call(
        kernel,
        out_shape=jax.ShapeDtypeStruct((batch, padded[-1]), jnp.float32),
        grid=grid,
        in_specs=in_specs,
        out_specs=pl.BlockSpec((tm, padded[-1]), lambda i: (i, 0)),
        scratch_shapes=[pltpu.VMEM((tm, max_hidden), jnp.float32),
                        pltpu.VMEM((tm, max_hidden), jnp.float32)],
        compiler_params=pltpu.CompilerParams(
            dimension_semantics=("parallel",),
            vmem_limit_bytes=vmem_limit),
        cost_estimate=pl.CostEstimate(
            flops=flops,
            transcendentals=transcendentals,
            bytes_accessed=bytes_accessed),
    )


def mlp_forward(prepared: PreparedMlpParams, x):
    """Pallas-backed forward of MlpModel (tanh hidden act, no output act)."""
    flat, padded, in_features, out_features = prepared
    num_layers = len(flat) // 2
    batch = x.shape[0]
    assert x.shape[1] == in_features

    dual_core = "v7" in _device_kind()
    tm = _choose_tm(batch, dual_core)
    grid = (pl.cdiv(batch, tm),)

    # Feature-dim zero padding of x is REQUIRED (padded lanes must be exactly
    # 0); batch is NOT padded — Pallas masks the partial last block.
    x_pad = jnp.pad(x.astype(jnp.float32),
                    ((0, 0), (0, padded[0] - in_features)))

    # Explicit scoped-VMEM budget: conservative (double-buffered) resident
    # footprint + transient slabs, with headroom; clamped to a per-gen cap.
    param_bytes = sum(int(p.size) * p.dtype.itemsize for p in flat)
    max_w = max(padded)
    max_hidden = max(padded[1:-1]) if num_layers > 1 else 128
    act_bytes = tm * (padded[0] + padded[-1] + max_hidden) * 4
    resident = 2 * param_bytes + 2 * act_bytes + 2 * tm * max_w * 4
    vmem_limit = int(resident * 1.4) + (4 << 20)
    cap = (64 << 20) if dual_core else (100 << 20)
    vmem_limit = max(min(vmem_limit, cap), 16 << 20)

    try:
        call = _build_call(num_layers, padded, tm, grid, batch, param_bytes,
                           single_buffer_params=True, vmem_limit=vmem_limit)
        out_pad = call(x_pad, *flat)
    except Exception:
        # Fallback if this JAX build rejects pipeline_mode=pl.Buffered(1).
        call = _build_call(num_layers, padded, tm, grid, batch, param_bytes,
                           single_buffer_params=False, vmem_limit=vmem_limit)
        out_pad = call(x_pad, *flat)

    return out_pad[:, :out_features]


# --------------------------------------------------------------------------
# Reference + init (mimics torch.nn.Linear default init)
# --------------------------------------------------------------------------
def init_mlp_params(key, input_size, hidden_sizes, output_size):
    params = []
    sizes = [input_size] + list(hidden_sizes) + [output_size]
    for i in range(len(sizes) - 1):
        fan_in, fan_out = sizes[i], sizes[i + 1]
        key, wk, bk = jax.random.split(key, 3)
        bound = 1.0 / math.sqrt(fan_in)
        w = jax.random.uniform(wk, (fan_in, fan_out), jnp.float32, -bound, bound)
        b = jax.random.uniform(bk, (fan_out,), jnp.float32, -bound, bound)
        params.append((w, b))
    return params


def mlp_forward_ref(params, x):
    for w, b in params[:-1]:
        x = jnp.tanh(x @ w + b)
    w, b = params[-1]
    return x @ w + b


if __name__ == "__main__":
    key = jax.random.PRNGKey(0)

    batch = 8
    input_size = 32
    hidden_sizes = (64, 32)
    output_size = 16

    key, pkey, xkey = jax.random.split(key, 3)
    params = init_mlp_params(pkey, input_size, hidden_sizes, output_size)
    x = jax.random.normal(xkey, (batch, input_size), jnp.float32)

    prepared = prepare_mlp_params(params)   # padding/casting done ONCE
    out = mlp_forward(prepared, x)
    out = jax.block_until_ready(out)

    ref = mlp_forward_ref(params, x)
    assert out.shape == (batch, output_size)
    max_err = float(jnp.max(jnp.abs(out - ref)))
    # bf16 MXU operands with f32 accumulation -> loosened tolerance vs f32 ref.
    assert max_err < 2e-2, f"mismatch vs JAX reference, max_err={max_err}"

    print("KERNEL_OK")
</pallas_src>

<mosaic_0001>
module attributes {stable_mosaic.version = 11 : i64} {
  func.func @_mlp_fused_kernel(%arg0: i32, %arg1: memref<8x128xf32, #tpu.memory_space<vmem>>, %arg2: memref<128x128xbf16, #tpu.memory_space<vmem>>, %arg3: memref<1x128xf32, #tpu.memory_space<vmem>>, %arg4: memref<128x128xbf16, #tpu.memory_space<vmem>>, %arg5: memref<1x128xf32, #tpu.memory_space<vmem>>, %arg6: memref<128x128xbf16, #tpu.memory_space<vmem>>, %arg7: memref<1x128xf32, #tpu.memory_space<vmem>>, %arg8: memref<8x128xf32, #tpu.memory_space<vmem>>, %arg9: memref<8x128xf32, #tpu.memory_space<vmem>>, %arg10: memref<8x128xf32, #tpu.memory_space<vmem>>) attributes {dimension_semantics = [#tpu.dimension_semantics<parallel>], iteration_bounds = array<i64: 1>, scalar_prefetch = 0 : i64, scratch_operands = 2 : i64, tpu.core_type = #tpu.core_type<tc>, window_params = [{transform_indices = @transform_0, window_bounds = array<i64: 8, 128>}, {pipeline_mode = #tpu.pipeline_mode<synchronous>, transform_indices = @transform_1, window_bounds = array<i64: 128, 128>}, {pipeline_mode = #tpu.pipeline_mode<synchronous>, transform_indices = @transform_2, window_bounds = array<i64: 1, 128>}, {pipeline_mode = #tpu.pipeline_mode<synchronous>, transform_indices = @transform_3, window_bounds = array<i64: 128, 128>}, {pipeline_mode = #tpu.pipeline_mode<synchronous>, transform_indices = @transform_4, window_bounds = array<i64: 1, 128>}, {pipeline_mode = #tpu.pipeline_mode<synchronous>, transform_indices = @transform_5, window_bounds = array<i64: 128, 128>}, {pipeline_mode = #tpu.pipeline_mode<synchronous>, transform_indices = @transform_6, window_bounds = array<i64: 1, 128>}, {transform_indices = @transform_7, window_bounds = array<i64: 8, 128>}]} {
    %c0 = arith.constant 0 : index
    %c0_0 = arith.constant 0 : index
    %0 = vector.load %arg1[%c0, %c0_0] : memref<8x128xf32, #tpu.memory_space<vmem>>, vector<8x128xf32>
    %1 = arith.truncf %0 : vector<8x128xf32> to vector<8x128xbf16>
    %c0_1 = arith.constant 0 : index
    %c0_2 = arith.constant 0 : index
    %2 = vector.load %arg2[%c0_1, %c0_2] : memref<128x128xbf16, #tpu.memory_space<vmem>>, vector<128x128xbf16>
    %cst = arith.constant dense<0.000000e+00> : vector<8x128xf32>
    %3 = tpu.matmul %1, %2, %cst {dimension_numbers = #tpu.dot_dimension_numbers<[1], [0], [0], [1], [0, 0, 1, 1], [], []>} : vector<8x128xbf16>, vector<128x128xbf16>, vector<8x128xf32> -> vector<8x128xf32>
    %c0_3 = arith.constant 0 : index
    %c0_4 = arith.constant 0 : index
    %4 = vector.load %arg3[%c0_3, %c0_4] : memref<1x128xf32, #tpu.memory_space<vmem>>, vector<1x128xf32>
    %5 = vector.broadcast %4 : vector<1x128xf32> to vector<8x128xf32>
    %6 = arith.addf %3, %5 : vector<8x128xf32>
    %7 = math.tanh %6 : vector<8x128xf32>
    %c0_5 = arith.constant 0 : index
    %c0_6 = arith.constant 0 : index
    %8 = vector.load %arg9[%c0_5, %c0_6] : memref<8x128xf32, #tpu.memory_space<vmem>>, vector<8x128xf32>
    tpu.vector_store %arg9[%c0_5, %c0_6], %7 {strides = array<i32>} : memref<8x128xf32, #tpu.memory_space<vmem>>, vector<8x128xf32>,
    %c0_7 = arith.constant 0 : index
    %c0_8 = arith.constant 0 : index
    %9 = vector.load %arg9[%c0_7, %c0_8] : memref<8x128xf32, #tpu.memory_space<vmem>>, vector<8x128xf32>
    %10 = arith.truncf %9 : vector<8x128xf32> to vector<8x128xbf16>
    %c0_9 = arith.constant 0 : index
    %c0_10 = arith.constant 0 : index
    %11 = vector.load %arg4[%c0_9, %c0_10] : memref<128x128xbf16, #tpu.memory_space<vmem>>, vector<128x128xbf16>
    %cst_11 = arith.constant dense<0.000000e+00> : vector<8x128xf32>
    %12 = tpu.matmul %10, %11, %cst_11 {dimension_numbers = #tpu.dot_dimension_numbers<[1], [0], [0], [1], [0, 0, 1, 1], [], []>} : vector<8x128xbf16>, vector<128x128xbf16>, vector<8x128xf32> -> vector<8x128xf32>
    %c0_12 = arith.constant 0 : index
    %c0_13 = arith.constant 0 : index
    %13 = vector.load %arg5[%c0_12, %c0_13] : memref<1x128xf32, #tpu.memory_space<vmem>>, vector<1x128xf32>
    %14 = vector.broadcast %13 : vector<1x128xf32> to vector<8x128xf32>
    %15 = arith.addf %12, %14 : vector<8x128xf32>
    %16 = math.tanh %15 : vector<8x128xf32>
    %c0_14 = arith.constant 0 : index
    %c0_15 = arith.constant 0 : index
    %17 = vector.load %arg10[%c0_14, %c0_15] : memref<8x128xf32, #tpu.memory_space<vmem>>, vector<8x128xf32>
    tpu.vector_store %arg10[%c0_14, %c0_15], %16 {strides = array<i32>} : memref<8x128xf32, #tpu.memory_space<vmem>>, vector<8x128xf32>,
    %c0_16 = arith.constant 0 : index
    %c0_17 = arith.constant 0 : index
    %18 = vector.load %arg10[%c0_16, %c0_17] : memref<8x128xf32, #tpu.memory_space<vmem>>, vector<8x128xf32>
    %19 = arith.truncf %18 : vector<8x128xf32> to vector<8x128xbf16>
    %c0_18 = arith.constant 0 : index
    %c0_19 = arith.constant 0 : index
    %20 = vector.load %arg6[%c0_18, %c0_19] : memref<128x128xbf16, #tpu.memory_space<vmem>>, vector<128x128xbf16>
    %cst_20 = arith.constant dense<0.000000e+00> : vector<8x128xf32>
    %21 = tpu.matmul %19, %20, %cst_20 {dimension_numbers = #tpu.dot_dimension_numbers<[1], [0], [0], [1], [0, 0, 1, 1], [], []>} : vector<8x128xbf16>, vector<128x128xbf16>, vector<8x128xf32> -> vector<8x128xf32>
    %c0_21 = arith.constant 0 : index
    %c0_22 = arith.constant 0 : index
    %22 = vector.load %arg7[%c0_21, %c0_22] : memref<1x128xf32, #tpu.memory_space<vmem>>, vector<1x128xf32>
    %23 = vector.broadcast %22 : vector<1x128xf32> to vector<8x128xf32>
    %24 = arith.addf %21, %23 : vector<8x128xf32>
    %c0_23 = arith.constant 0 : index
    %c0_24 = arith.constant 0 : index
    %25 = vector.load %arg8[%c0_23, %c0_24] : memref<8x128xf32, #tpu.memory_space<vmem>>, vector<8x128xf32>
    tpu.vector_store %arg8[%c0_23, %c0_24], %24 {strides = array<i32>} : memref<8x128xf32, #tpu.memory_space<vmem>>, vector<8x128xf32>,
    return
  }
  func.func @transform_0(%arg0: i32) -> (i32, i32) {
    %c0_i32 = arith.constant 0 : i32
    %c0_i32_0 = arith.constant 0 : i32
    return %arg0, %c0_i32 : i32, i32
  }
  func.func @transform_1(%arg0: i32) -> (i32, i32) {
    %c0_i32 = arith.constant 0 : i32
    %c0_i32_0 = arith.constant 0 : i32
    %c0_i32_1 = arith.constant 0 : i32
    return %c0_i32, %c0_i32_0 : i32, i32
  }
  func.func @transform_2(%arg0: i32) -> (i32, i32) {
    %c0_i32 = arith.constant 0 : i32
    %c0_i32_0 = arith.constant 0 : i32
    %c0_i32_1 = arith.constant 0 : i32
    return %c0_i32, %c0_i32_0 : i32, i32
  }
  func.func @transform_3(%arg0: i32) -> (i32, i32) {
    %c0_i32 = arith.constant 0 : i32
    %c0_i32_0 = arith.constant 0 : i32
    %c0_i32_1 = arith.constant 0 : i32
    return %c0_i32, %c0_i32_0 : i32, i32
  }
  func.func @transform_4(%arg0: i32) -> (i32, i32) {
    %c0_i32 = arith.constant 0 : i32
    %c0_i32_0 = arith.constant 0 : i32
    %c0_i32_1 = arith.constant 0 : i32
    return %c0_i32, %c0_i32_0 : i32, i32
  }
  func.func @transform_5(%arg0: i32) -> (i32, i32) {
    %c0_i32 = arith.constant 0 : i32
    %c0_i32_0 = arith.constant 0 : i32
    %c0_i32_1 = arith.constant 0 : i32
    return %c0_i32, %c0_i32_0 : i32, i32
  }
  func.func @transform_6(%arg0: i32) -> (i32, i32) {
    %c0_i32 = arith.constant 0 : i32
    %c0_i32_0 = arith.constant 0 : i32
    %c0_i32_1 = arith.constant 0 : i32
    return %c0_i32, %c0_i32_0 : i32, i32
  }
  func.func @transform_7(%arg0: i32) -> (i32, i32) {
    %c0_i32 = arith.constant 0 : i32
    %c0_i32_0 = arith.constant 0 : i32
    return %arg0, %c0_i32 : i32, i32
  }
}

module attributes {stable_mosaic.version = 11 : i64} {
  func.func @_mlp_fused_kernel(%arg0: i32, %arg1: memref<8x128xf32, #tpu.memory_space<vmem>>, %arg2: memref<128x128xbf16, #tpu.memory_space<vmem>>, %arg3: memref<1x128xf32, #tpu.memory_space<vmem>>, %arg4: memref<128x128xbf16, #tpu.memory_space<vmem>>, %arg5: memref<1x128xf32, #tpu.memory_space<vmem>>, %arg6: memref<128x128xbf16, #tpu.memory_space<vmem>>, %arg7: memref<1x128xf32, #tpu.memory_space<vmem>>, %arg8: memref<8x128xf32, #tpu.memory_space<vmem>>, %arg9: memref<8x128xf32, #tpu.memory_space<vmem>>, %arg10: memref<8x128xf32, #tpu.memory_space<vmem>>) attributes {dimension_semantics = [#tpu.dimension_semantics<parallel>], iteration_bounds = array<i64: 1>, scalar_prefetch = 0 : i64, scratch_operands = 2 : i64, tpu.core_type = #tpu.core_type<tc>, window_params = [{transform_indices = @transform_0, window_bounds = array<i64: 8, 128>}, {pipeline_mode = #tpu.pipeline_mode<synchronous>, transform_indices = @transform_1, window_bounds = array<i64: 128, 128>}, {pipeline_mode = #tpu.pipeline_mode<synchronous>, transform_indices = @transform_2, window_bounds = array<i64: 1, 128>}, {pipeline_mode = #tpu.pipeline_mode<synchronous>, transform_indices = @transform_3, window_bounds = array<i64: 128, 128>}, {pipeline_mode = #tpu.pipeline_mode<synchronous>, transform_indices = @transform_4, window_bounds = array<i64: 1, 128>}, {pipeline_mode = #tpu.pipeline_mode<synchronous>, transform_indices = @transform_5, window_bounds = array<i64: 128, 128>}, {pipeline_mode = #tpu.pipeline_mode<synchronous>, transform_indices = @transform_6, window_bounds = array<i64: 1, 128>}, {transform_indices = @transform_7, window_bounds = array<i64: 8, 128>}]} {
    %c0 = arith.constant 0 : index
    %c0_0 = arith.constant 0 : index
    %0 = vector.load %arg1[%c0, %c0_0] : memref<8x128xf32, #tpu.memory_space<vmem>>, vector<8x128xf32>
    %1 = arith.truncf %0 : vector<8x128xf32> to vector<8x128xbf16>
    %c0_1 = arith.constant 0 : index
    %c0_2 = arith.constant 0 : index
    %2 = vector.load %arg2[%c0_1, %c0_2] : memref<128x128xbf16, #tpu.memory_space<vmem>>, vector<128x128xbf16>
    %cst = arith.constant dense<0.000000e+00> : vector<8x128xf32>
    %3 = tpu.matmul %1, %2, %cst {dimension_numbers = #tpu.dot_dimension_numbers<[1], [0], [0], [1], [0, 0, 1, 1], [], []>} : vector<8x128xbf16>, vector<128x128xbf16>, vector<8x128xf32> -> vector<8x128xf32>
    %c0_3 = arith.constant 0 : index
    %c0_4 = arith.constant 0 : index
    %4 = vector.load %arg3[%c0_3, %c0_4] : memref<1x128xf32, #tpu.memory_space<vmem>>, vector<1x128xf32>
    %5 = vector.broadcast %4 : vector<1x128xf32> to vector<8x128xf32>
    %6 = arith.addf %3, %5 : vector<8x128xf32>
    %7 = math.tanh %6 : vector<8x128xf32>
    %c0_5 = arith.constant 0 : index
    %c0_6 = arith.constant 0 : index
    %8 = vector.load %arg9[%c0_5, %c0_6] : memref<8x128xf32, #tpu.memory_space<vmem>>, vector<8x128xf32>
    tpu.vector_store %arg9[%c0_5, %c0_6], %7 {strides = array<i32>} : memref<8x128xf32, #tpu.memory_space<vmem>>, vector<8x128xf32>,
    %c0_7 = arith.constant 0 : index
    %c0_8 = arith.constant 0 : index
    %9 = vector.load %arg9[%c0_7, %c0_8] : memref<8x128xf32, #tpu.memory_space<vmem>>, vector<8x128xf32>
    %10 = arith.truncf %9 : vector<8x128xf32> to vector<8x128xbf16>
    %c0_9 = arith.constant 0 : index
    %c0_10 = arith.constant 0 : index
    %11 = vector.load %arg4[%c0_9, %c0_10] : memref<128x128xbf16, #tpu.memory_space<vmem>>, vector<128x128xbf16>
    %cst_11 = arith.constant dense<0.000000e+00> : vector<8x128xf32>
    %12 = tpu.matmul %10, %11, %cst_11 {dimension_numbers = #tpu.dot_dimension_numbers<[1], [0], [0], [1], [0, 0, 1, 1], [], []>} : vector<8x128xbf16>, vector<128x128xbf16>, vector<8x128xf32> -> vector<8x128xf32>
    %c0_12 = arith.constant 0 : index
    %c0_13 = arith.constant 0 : index
    %13 = vector.load %arg5[%c0_12, %c0_13] : memref<1x128xf32, #tpu.memory_space<vmem>>, vector<1x128xf32>
    %14 = vector.broadcast %13 : vector<1x128xf32> to vector<8x128xf32>
    %15 = arith.addf %12, %14 : vector<8x128xf32>
    %16 = math.tanh %15 : vector<8x128xf32>
    %c0_14 = arith.constant 0 : index
    %c0_15 = arith.constant 0 : index
    %17 = vector.load %arg10[%c0_14, %c0_15] : memref<8x128xf32, #tpu.memory_space<vmem>>, vector<8x128xf32>
    tpu.vector_store %arg10[%c0_14, %c0_15], %16 {strides = array<i32>} : memref<8x128xf32, #tpu.memory_space<vmem>>, vector<8x128xf32>,
    %c0_16 = arith.constant 0 : index
    %c0_17 = arith.constant 0 : index
    %18 = vector.load %arg10[%c0_16, %c0_17] : memref<8x128xf32, #tpu.memory_space<vmem>>, vector<8x128xf32>
    %19 = arith.truncf %18 : vector<8x128xf32> to vector<8x128xbf16>
    %c0_18 = arith.constant 0 : index
    %c0_19 = arith.constant 0 : index
    %20 = vector.load %arg6[%c0_18, %c0_19] : memref<128x128xbf16, #tpu.memory_space<vmem>>, vector<128x128xbf16>
    %cst_20 = arith.constant dense<0.000000e+00> : vector<8x128xf32>
    %21 = tpu.matmul %19, %20, %cst_20 {dimension_numbers = #tpu.dot_dimension_numbers<[1], [0], [0], [1], [0, 0, 1, 1], [], []>} : vector<8x128xbf16>, vector<128x128xbf16>, vector<8x128xf32> -> vector<8x128xf32>
    %c0_21 = arith.constant 0 : index
    %c0_22 = arith.constant 0 : index
    %22 = vector.load %arg7[%c0_21, %c0_22] : memref<1x128xf32, #tpu.memory_space<vmem>>, vector<1x128xf32>
    %23 = vector.broadcast %22 : vector<1x128xf32> to vector<8x128xf32>
    %24 = arith.addf %21, %23 : vector<8x128xf32>
    %c0_23 = arith.constant 0 : index
    %c0_24 = arith.constant 0 : index
    %25 = vector.load %arg8[%c0_23, %c0_24] : memref<8x128xf32, #tpu.memory_space<vmem>>, vector<8x128xf32>
    tpu.vector_store %arg8[%c0_23, %c0_24], %24 {strides = array<i32>} : memref<8x128xf32, #tpu.memory_space<vmem>>, vector<8x128xf32>,
    return
  }
  func.func @transform_0(%arg0: i32) -> (i32, i32) {
    %c0_i32 = arith.constant 0 : i32
    %c0_i32_0 = arith.constant 0 : i32
    return %arg0, %c0_i32 : i32, i32
  }
  func.func @transform_1(%arg0: i32) -> (i32, i32) {
    %c0_i32 = arith.constant 0 : i32
    %c0_i32_0 = arith.constant 0 : i32
    %c0_i32_1 = arith.constant 0 : i32
    return %c0_i32, %c0_i32_0 : i32, i32
  }
  func.func @transform_2(%arg0: i32) -> (i32, i32) {
    %c0_i32 = arith.constant 0 : i32
    %c0_i32_0 = arith.constant 0 : i32
    %c0_i32_1 = arith.constant 0 : i32
    return %c0_i32, %c0_i32_0 : i32, i32
  }
  func.func @transform_3(%arg0: i32) -> (i32, i32) {
    %c0_i32 = arith.constant 0 : i32
    %c0_i32_0 = arith.constant 0 : i32
    %c0_i32_1 = arith.constant 0 : i32
    return %c0_i32, %c0_i32_0 : i32, i32
  }
  func.func @transform_4(%arg0: i32) -> (i32, i32) {
    %c0_i32 = arith.constant 0 : i32
    %c0_i32_0 = arith.constant 0 : i32
    %c0_i32_1 = arith.constant 0 : i32
    return %c0_i32, %c0_i32_0 : i32, i32
  }
  func.func @transform_5(%arg0: i32) -> (i32, i32) {
    %c0_i32 = arith.constant 0 : i32
    %c0_i32_0 = arith.constant 0 : i32
    %c0_i32_1 = arith.constant 0 : i32
    return %c0_i32, %c0_i32_0 : i32, i32
  }
  func.func @transform_6(%arg0: i32) -> (i32, i32) {
    %c0_i32 = arith.constant 0 : i32
    %c0_i32_0 = arith.constant 0 : i32
    %c0_i32_1 = arith.constant 0 : i32
    return %c0_i32, %c0_i32_0 : i32, i32
  }
  func.func @transform_7(%arg0: i32) -> (i32, i32) {
    %c0_i32 = arith.constant 0 : i32
    %c0_i32_0 = arith.constant 0 : i32
    return %arg0, %c0_i32 : i32, i32
  }
}

</mosaic_0001>

<llo_original>
// kernel: tpu_custom_call.1
$region0: #{tpu_custom_call.1}
  #allocation0 [shape = 'u32[]', space=smem, size = 0x4, offset = 0x4, fixed_abs, tag = 'smem constant byte address 0x4 - core index']
  #allocation1 [shape = 'u32[144,128]{1,0:T(1,128)}', space=vmem, size = 0x12000, scoped, tag = 'internal scratch']
  #allocation2 [shape = 'f32[8,128]{1,0:T(8,128)}', space=vmem, size = 0x1000, scoped, tag = 'scratch operand']
  #allocation3 [shape = 'f32[8,128]{1,0:T(8,128)}', space=vmem, size = 0x1000, scoped, tag = 'scratch operand']
  %s0 = inlined_call_operand.hbm [shape: f32[8,128], index: 0, kind: input, shape index: {}]
  %s1 = inlined_call_operand.hbm [shape: bf16[128,128], index: 1, kind: input, shape index: {}]
  %s2 = inlined_call_operand.vmem [shape: f32[1,128], index: 2, kind: input, shape index: {}]
  %s3 = inlined_call_operand.hbm [shape: bf16[128,128], index: 3, kind: input, shape index: {}]
  %s4 = inlined_call_operand.vmem [shape: f32[1,128], index: 4, kind: input, shape index: {}]
  %s5 = inlined_call_operand.hbm [shape: bf16[128,128], index: 5, kind: input, shape index: {}]
  %s6 = inlined_call_operand.vmem [shape: f32[1,128], index: 6, kind: input, shape index: {}]
  %s7 = inlined_call_operand.hbm [shape: f32[8,128], index: 7, kind: output, shape index: {}]
  %s8 = sld [smem:[#allocation0]]
  $region54: #{tpu_custom_call.1} parent=0
    _
  %s10 = ssub.s32 1, %s8
  %s11 = scalar_select 0, %s10, %s8
  $region1: #{tpu_custom_call.1} parent=0
    #allocation4 [shape = 'u8[4096]{0}', space=vmem, size = 0x1000, scoped, tag = 'input window, operand 0, single buffered']
    #allocation5 [shape = 's32[1]{0}', space=sflag, size = 0x4, scoped, tag = 'scoped memory for tpu_custom_call.1']
    #allocation6 [shape = 's32[1]{0}', space=sflag, size = 0x4, scoped, tag = 'scoped memory for tpu_custom_call.1']
    #allocation7 [shape = 'u8[32768]{0}', space=vmem, size = 0x8000, scoped, tag = 'input window, operand 1, single buffered']
    #allocation8 [shape = 's32[1]{0}', space=sflag, size = 0x4, scoped, tag = 'scoped memory for tpu_custom_call.1']
    #allocation9 [shape = 'u8[32768]{0}', space=vmem, size = 0x8000, scoped, tag = 'input window, operand 3, single buffered']
    #allocation10 [shape = 'u8[32768]{0}', space=vmem, size = 0x8000, scoped, tag = 'input window, operand 5, single buffered']
    #allocation11 [shape = 's32[1]{0}', space=sflag, size = 0x4, scoped, tag = 'scoped memory for tpu_custom_call.1']
    #allocation12 [shape = 'u8[4096]{0}', space=vmem, size = 0x1000, scoped, tag = 'output window, operand 0, single buffered']
    %12 = vsyncpa [#allocation5], 0
    %13 = vsyncpa [#allocation8], 0
    %14 = vsyncpa [#allocation11], 0
    %15 = vsyncpa [#allocation6], 0
    // Predicated region
    $region2: #{tpu_custom_call.1} parent=1 // pred_check
      _
    $region3: #{tpu_custom_call.1} parent=1 // pred_check_branch
      %17 = sbr.rel (0) target = $region5
    $region4: #{tpu_custom_call.1} parent=1 // pred_region
      %s19 = ssub.s32 128, 128
      %20 = vsyncadd [#allocation5], %s19
      %s22 = sshll.u32 [#allocation4], 4
      %s23 = int_to_ptr.vmem [resolvable:$true] %s22
      %25 = dma.hbm_to_vmem [thread:$0]  %s0, 128, %s23, [#allocation5]
    $region5: #{tpu_custom_call.1} parent=1 // pred_fallthru
      _
    // Predicated region
    $region6: #{tpu_custom_call.1} parent=1 // pred_check
      _
    $region7: #{tpu_custom_call.1} parent=1 // pred_check_branch
      %27 = sbr.rel (0) target = $region9
    $region8: #{tpu_custom_call.1} parent=1 // pred_region
      %s29 = ssub.s32 1024, 1024
      %30 = vsyncadd [#allocation8], %s29
      %s31 = sshll.u32 [#allocation7], 4
      %s32 = int_to_ptr.vmem [resolvable:$true] %s31
      %37 = dma.hbm_to_vmem [thread:$0]  %s1, 1024, %s32, [#allocation8], 64, 64, 4
    $region9: #{tpu_custom_call.1} parent=1 // pred_fallthru
      _
    // Predicated region
    $region10: #{tpu_custom_call.1} parent=1 // pred_check
      _
    $region11: #{tpu_custom_call.1} parent=1 // pred_check_branch
      %39 = sbr.rel (0) target = $region13
    $region12: #{tpu_custom_call.1} parent=1 // pred_region
      _
    $region13: #{tpu_custom_call.1} parent=1 // pred_fallthru
      _
    // Predicated region
    $region14: #{tpu_custom_call.1} parent=1 // pred_check
      _
    $region15: #{tpu_custom_call.1} parent=1 // pred_check_branch
      %41 = sbr.rel (0) target = $region17
    $region16: #{tpu_custom_call.1} parent=1 // pred_region
      %s43 = ssub.s32 1024, 1024
      %44 = vsyncadd [#allocation8], %s43
      %s45 = sshll.u32 [#allocation9], 4
      %s46 = int_to_ptr.vmem [resolvable:$true] %s45
      %51 = dma.hbm_to_vmem [thread:$0]  %s3, 1024, %s46, [#allocation8], 64, 64, 4
    $region17: #{tpu_custom_call.1} parent=1 // pred_fallthru
      _
    // Predicated region
    $region18: #{tpu_custom_call.1} parent=1 // pred_check
      _
    $region19: #{tpu_custom_call.1} parent=1 // pred_check_branch
      %53 = sbr.rel (0) target = $region21
    $region20: #{tpu_custom_call.1} parent=1 // pred_region
      _
    $region21: #{tpu_custom_call.1} parent=1 // pred_fallthru
      _
    // Predicated region
    $region22: #{tpu_custom_call.1} parent=1 // pred_check
      _
    $region23: #{tpu_custom_call.1} parent=1 // pred_check_branch
      %55 = sbr.rel (0) target = $region25
    $region24: #{tpu_custom_call.1} parent=1 // pred_region
      %s57 = ssub.s32 1024, 1024
      %58 = vsyncadd [#allocation11], %s57
      %s59 = sshll.u32 [#allocation10], 4
      %s60 = int_to_ptr.vmem [resolvable:$true] %s59
      %65 = dma.hbm_to_vmem [thread:$0]  %s5, 1024, %s60, [#allocation11], 64, 64, 4
    $region25: #{tpu_custom_call.1} parent=1 // pred_fallthru
      _
    // Predicated region
    $region26: #{tpu_custom_call.1} parent=1 // pred_check
      _
    $region27: #{tpu_custom_call.1} parent=1 // pred_check_branch
      %67 = sbr.rel (0) target = $region29
    $region28: #{tpu_custom_call.1} parent=1 // pred_region
      _
    $region29: #{tpu_custom_call.1} parent=1 // pred_fallthru
      _
    // Predicated region
    $region30: #{tpu_custom_call.1} parent=1 // pred_check
      _
    $region31: #{tpu_custom_call.1} parent=1 // pred_check_branch
      %69 = sbr.rel (0) target = $region33
    $region32: #{tpu_custom_call.1} parent=1 // pred_region
      %70 = dma.done [#allocation5], 128
    $region33: #{tpu_custom_call.1} parent=1 // pred_fallthru
      _
    // Predicated region
    $region34: #{tpu_custom_call.1} parent=1 // pred_check
      _
    $region35: #{tpu_custom_call.1} parent=1 // pred_check_branch
      %72 = sbr.rel (0) target = $region37
    $region36: #{tpu_custom_call.1} parent=1 // pred_region
      %73 = dma.done [#allocation8], 1024
    $region37: #{tpu_custom_call.1} parent=1 // pred_fallthru
      _
    // Predicated region
    $region38: #{tpu_custom_call.1} parent=1 // pred_check
      _
    $region39: #{tpu_custom_call.1} parent=1 // pred_check_branch
      %75 = sbr.rel (0) target = $region41
    $region40: #{tpu_custom_call.1} parent=1 // pred_region
      %76 = dma.done [#allocation8], 1024
    $region41: #{tpu_custom_call.1} parent=1 // pred_fallthru
      _
    // Predicated region
    $region42: #{tpu_custom_call.1} parent=1 // pred_check
      _
    $region43: #{tpu_custom_call.1} parent=1 // pred_check_branch
      %78 = sbr.rel (0) target = $region45
    $region44: #{tpu_custom_call.1} parent=1 // pred_region
      %79 = dma.done [#allocation11], 1024
    $region45: #{tpu_custom_call.1} parent=1 // pred_fallthru
      _
    %v81 = vld [vmem:[#allocation4] sm:$0xff]
    %v82 = vpack.c.bf16 %v81, %v81
    %v83 = vld [vmem:[#allocation7] sm:$0xf]
    %v84 = vld [vmem:[#allocation7 + $0x4] sm:$0xf]
    %v85 = vld [vmem:[#allocation7 + $0x8] sm:$0xf]
    %v86 = vld [vmem:[#allocation7 + $0xc] sm:$0xf]
    %v87 = vld [vmem:[#allocation7 + $0x10] sm:$0xf]
    %v88 = vld [vmem:[#allocation7 + $0x14] sm:$0xf]
    %v89 = vld [vmem:[#allocation7 + $0x18] sm:$0xf]
    %v90 = vld [vmem:[#allocation7 + $0x1c] sm:$0xf]
    %v91 = vld [vmem:[#allocation7 + $0x20] sm:$0xf]
    %v92 = vld [vmem:[#allocation7 + $0x24] sm:$0xf]
    %v93 = vld [vmem:[#allocation7 + $0x28] sm:$0xf]
    %v94 = vld [vmem:[#allocation7 + $0x2c] sm:$0xf]
    %v95 = vld [vmem:[#allocation7 + $0x30] sm:$0xf]
    %v96 = vld [vmem:[#allocation7 + $0x34] sm:$0xf]
    %v97 = vld [vmem:[#allocation7 + $0x38] sm:$0xf]
    %v98 = vld [vmem:[#allocation7 + $0x3c] sm:$0xf]
    %v99 = vld [vmem:[%s2] sm:$0x1]
    %v101 = vlaneseq
    %v102 = vshrl.u32 %v101, 7
    %v103 = vsub.s32 0, %v102
    %v104 = vrot.slane %v99, %v103
    %v122 = vunpack.c.l.b16 %v83
    %v123 = vunpack.c.l.b16 %v84
    %v124 = vunpack.c.l.b16 %v85
    %v125 = vunpack.c.l.b16 %v86
    %v126 = vunpack.c.l.b16 %v87
    %v127 = vunpack.c.l.b16 %v88
    %v128 = vunpack.c.l.b16 %v89
    %v129 = vunpack.c.l.b16 %v90
    %v130 = vunpack.c.l.b16 %v91
    %v131 = vunpack.c.l.b16 %v92
    %v132 = vunpack.c.l.b16 %v93
    %v133 = vunpack.c.l.b16 %v94
    %v134 = vunpack.c.l.b16 %v95
    %v135 = vunpack.c.l.b16 %v96
    %v136 = vunpack.c.l.b16 %v97
    %v137 = vunpack.c.l.b16 %v98
    %v138 = vpack.c.b16 %v123, %v122
    %v139 = vpack.c.b16 %v125, %v124
    %v140 = vpack.c.b16 %v127, %v126
    %v141 = vpack.c.b16 %v129, %v128
    %v142 = vpack.c.b16 %v131, %v130
    %v143 = vpack.c.b16 %v133, %v132
    %v144 = vpack.c.b16 %v135, %v134
    %v145 = vpack.c.b16 %v137, %v136
    %154 = vmatprep.subr.bf16.mxu0 0
    %155 = vmatpush1.bf16.msra.mxu0 %v138
    %156 = vmatprep.subr.bf16.mxu0 0
    %157 = vmatpush1.bf16.msra.mxu0 %v139
    %158 = vmatprep.subr.bf16.mxu0 0
    %159 = vmatpush1.bf16.msra.mxu0 %v140
    %160 = vmatprep.subr.bf16.mxu0 0
    %161 = vmatpush1.bf16.msra.mxu0 %v141
    %162 = vmatprep.subr.bf16.mxu0 0
    %163 = vmatpush1.bf16.msra.mxu0 %v142
    %164 = vmatprep.subr.bf16.mxu0 0
    %165 = vmatpush1.bf16.msra.mxu0 %v143
    %166 = vmatprep.subr.bf16.mxu0 0
    %167 = vmatpush1.bf16.msra.mxu0 %v144
    %168 = vmatprep.subr.bf16.mxu0 0
    %169 = vmatpush1.bf16.msra.mxu0 %v145
    %170 = vmatprep.subr.bf16.mxu0 0
    %171 = vmatpush1.bf16.msra.mxu0 0
    %172 = vmatprep.subr.bf16.mxu0 0
    %173 = vmatpush1.bf16.msra.mxu0 0
    %174 = vmatprep.subr.bf16.mxu0 0
    %175 = vmatpush1.bf16.msra.mxu0 0
    %176 = vmatprep.subr.bf16.mxu0 0
    %177 = vmatpush1.bf16.msra.mxu0 0
    %178 = vmatprep.subr.bf16.mxu0 0
    %179 = vmatpush1.bf16.msra.mxu0 0
    %180 = vmatprep.subr.bf16.mxu0 0
    %181 = vmatpush1.bf16.msra.mxu0 0
    %182 = vmatprep.subr.bf16.mxu0 0
    %183 = vmatpush1.bf16.msra.mxu0 0
    %184 = vmatprep.subr.bf16.mxu0 0
    %185 = vmatpush1.bf16.msra.mxu0 0
    %186 = vmatprep.mubr.bf16.mxu0 0
    %187 = vmatmul.mubr.bf16.gmra.mrb[0].mxu0 %v82
    %v188 = vpop.f32.mrb[0].mxu0
    %v189 = vadd.f32 %v104, %v188
    %v190 = vpop.f32.mrb[0].mxu0
    %v191 = vpop.f32.mrb[0].mxu0
    %v192 = vpop.f32.mrb[0].mxu0
    %193 = vdwg.mxu0
    %v194 = vtanh.pop %v189
    %195 = vst [vmem:[#allocation2] sm:$0xff] %v194
    %v196 = vld [vmem:[#allocation2] sm:$0xff]
    %v197 = vpack.c.bf16 %v196, %v196
    %v198 = vld [vmem:[#allocation9] sm:$0xf]
    %v199 = vld [vmem:[#allocation9 + $0x4] sm:$0xf]
    %v200 = vld [vmem:[#allocation9 + $0x8] sm:$0xf]
    %v201 = vld [vmem:[#allocation9 + $0xc] sm:$0xf]
    %v202 = vld [vmem:[#allocation9 + $0x10] sm:$0xf]
    %v203 = vld [vmem:[#allocation9 + $0x14] sm:$0xf]
    %v204 = vld [vmem:[#allocation9 + $0x18] sm:$0xf]
    %v205 = vld [vmem:[#allocation9 + $0x1c] sm:$0xf]
    %v206 = vld [vmem:[#allocation9 + $0x20] sm:$0xf]
    %v207 = vld [vmem:[#allocation9 + $0x24] sm:$0xf]
    %v208 = vld [vmem:[#allocation9 + $0x28] sm:$0xf]
    %v209 = vld [vmem:[#allocation9 + $0x2c] sm:$0xf]
    %v210 = vld [vmem:[#allocation9 + $0x30] sm:$0xf]
    %v211 = vld [vmem:[#allocation9 + $0x34] sm:$0xf]
    %v212 = vld [vmem:[#allocation9 + $0x38] sm:$0xf]
    %v213 = vld [vmem:[#allocation9 + $0x3c] sm:$0xf]
    %v214 = vld [vmem:[%s4] sm:$0x1]
    %v216 = vlaneseq
    %v217 = vshrl.u32 %v216, 7
    %v218 = vsub.s32 0, %v217
    %v219 = vrot.slane %v214, %v218
    %v237 = vunpack.c.l.b16 %v198
    %v238 = vunpack.c.l.b16 %v199
    %v239 = vunpack.c.l.b16 %v200
    %v240 = vunpack.c.l.b16 %v201
    %v241 = vunpack.c.l.b16 %v202
    %v242 = vunpack.c.l.b16 %v203
    %v243 = vunpack.c.l.b16 %v204
    %v244 = vunpack.c.l.b16 %v205
    %v245 = vunpack.c.l.b16 %v206
    %v246 = vunpack.c.l.b16 %v207
    %v247 = vunpack.c.l.b16 %v208
    %v248 = vunpack.c.l.b16 %v209
    %v249 = vunpack.c.l.b16 %v210
    %v250 = vunpack.c.l.b16 %v211
    %v251 = vunpack.c.l.b16 %v212
    %v252 = vunpack.c.l.b16 %v213
    %v253 = vpack.c.b16 %v238, %v237
    %v254 = vpack.c.b16 %v240, %v239
    %v255 = vpack.c.b16 %v242, %v241
    %v256 = vpack.c.b16 %v244, %v243
    %v257 = vpack.c.b16 %v246, %v245
    %v258 = vpack.c.b16 %v248, %v247
    %v259 = vpack.c.b16 %v250, %v249
    %v260 = vpack.c.b16 %v252, %v251
    %269 = vmatprep.subr.bf16.mxu0 0
    %270 = vmatpush1.bf16.msra.mxu0 %v253
    %271 = vmatprep.subr.bf16.mxu0 0
    %272 = vmatpush1.bf16.msra.mxu0 %v254
    %273 = vmatprep.subr.bf16.mxu0 0
    %274 = vmatpush1.bf16.msra.mxu0 %v255
    %275 = vmatprep.subr.bf16.mxu0 0
    %276 = vmatpush1.bf16.msra.mxu0 %v256
    %277 = vmatprep.subr.bf16.mxu0 0
    %278 = vmatpush1.bf16.msra.mxu0 %v257
    %279 = vmatprep.subr.bf16.mxu0 0
    %280 = vmatpush1.bf16.msra.mxu0 %v258
    %281 = vmatprep.subr.bf16.mxu0 0
    %282 = vmatpush1.bf16.msra.mxu0 %v259
    %283 = vmatprep.subr.bf16.mxu0 0
    %284 = vmatpush1.bf16.msra.mxu0 %v260
    %285 = vmatprep.subr.bf16.mxu0 0
    %286 = vmatpush1.bf16.msra.mxu0 0
    %287 = vmatprep.subr.bf16.mxu0 0
    %288 = vmatpush1.bf16.msra.mxu0 0
    %289 = vmatprep.subr.bf16.mxu0 0
    %290 = vmatpush1.bf16.msra.mxu0 0
    %291 = vmatprep.subr.bf16.mxu0 0
    %292 = vmatpush1.bf16.msra.mxu0 0
    %293 = vmatprep.subr.bf16.mxu0 0
    %294 = vmatpush1.bf16.msra.mxu0 0
    %295 = vmatprep.subr.bf16.mxu0 0
    %296 = vmatpush1.bf16.msra.mxu0 0
    %297 = vmatprep.subr.bf16.mxu0 0
    %298 = vmatpush1.bf16.msra.mxu0 0
    %299 = vmatprep.subr.bf16.mxu0 0
    %300 = vmatpush1.bf16.msra.mxu0 0
    %301 = vmatprep.mubr.bf16.mxu0 0
    %302 = vmatmul.mubr.bf16.gmra.mrb[0].mxu0 %v197
    %v303 = vpop.f32.mrb[0].mxu0
    %v304 = vadd.f32 %v219, %v303
    %v305 = vpop.f32.mrb[0].mxu0
    %v306 = vpop.f32.mrb[0].mxu0
    %v307 = vpop.f32.mrb[0].mxu0
    %308 = vdwg.mxu0
    %v309 = vtanh.pop %v304
    %310 = vst [vmem:[#allocation3] sm:$0xff] %v309
    %v311 = vld [vmem:[#allocation3] sm:$0xff]
    %v312 = vpack.c.bf16 %v311, %v311
    %v313 = vld [vmem:[#allocation10] sm:$0xf]
    %v314 = vld [vmem:[#allocation10 + $0x4] sm:$0xf]
    %v315 = vld [vmem:[#allocation10 + $0x8] sm:$0xf]
    %v316 = vld [vmem:[#allocation10 + $0xc] sm:$0xf]
    %v317 = vld [vmem:[#allocation10 + $0x10] sm:$0xf]
    %v318 = vld [vmem:[#allocation10 + $0x14] sm:$0xf]
    %v319 = vld [vmem:[#allocation10 + $0x18] sm:$0xf]
    %v320 = vld [vmem:[#allocation10 + $0x1c] sm:$0xf]
    %v321 = vld [vmem:[#allocation10 + $0x20] sm:$0xf]
    %v322 = vld [vmem:[#allocation10 + $0x24] sm:$0xf]
    %v323 = vld [vmem:[#allocation10 + $0x28] sm:$0xf]
    %v324 = vld [vmem:[#allocation10 + $0x2c] sm:$0xf]
    %v325 = vld [vmem:[#allocation10 + $0x30] sm:$0xf]
    %v326 = vld [vmem:[#allocation10 + $0x34] sm:$0xf]
    %v327 = vld [vmem:[#allocation10 + $0x38] sm:$0xf]
    %v328 = vld [vmem:[#allocation10 + $0x3c] sm:$0xf]
    %v329 = vld [vmem:[%s6] sm:$0x1]
    %v331 = vlaneseq
    %v332 = vshrl.u32 %v331, 7
    %v333 = vsub.s32 0, %v332
    %v334 = vrot.slane %v329, %v333
    %v352 = vunpack.c.l.b16 %v313
    %v353 = vunpack.c.l.b16 %v314
    %v354 = vunpack.c.l.b16 %v315
    %v355 = vunpack.c.l.b16 %v316
    %v356 = vunpack.c.l.b16 %v317
    %v357 = vunpack.c.l.b16 %v318
    %v358 = vunpack.c.l.b16 %v319
    %v359 = vunpack.c.l.b16 %v320
    %v360 = vunpack.c.l.b16 %v321
    %v361 = vunpack.c.l.b16 %v322
    %v362 = vunpack.c.l.b16 %v323
    %v363 = vunpack.c.l.b16 %v324
    %v364 = vunpack.c.l.b16 %v325
    %v365 = vunpack.c.l.b16 %v326
    %v366 = vunpack.c.l.b16 %v327
    %v367 = vunpack.c.l.b16 %v328
    %v368 = vpack.c.b16 %v353, %v352
    %v369 = vpack.c.b16 %v355, %v354
    %v370 = vpack.c.b16 %v357, %v356
    %v371 = vpack.c.b16 %v359, %v358
    %v372 = vpack.c.b16 %v361, %v360
    %v373 = vpack.c.b16 %v363, %v362
    %v374 = vpack.c.b16 %v365, %v364
    %v375 = vpack.c.b16 %v367, %v366
    %384 = vmatprep.subr.bf16.mxu0 0
    %385 = vmatpush1.bf16.msra.mxu0 %v368
    %386 = vmatprep.subr.bf16.mxu0 0
    %387 = vmatpush1.bf16.msra.mxu0 %v369
    %388 = vmatprep.subr.bf16.mxu0 0
    %389 = vmatpush1.bf16.msra.mxu0 %v370
    %390 = vmatprep.subr.bf16.mxu0 0
    %391 = vmatpush1.bf16.msra.mxu0 %v371
    %392 = vmatprep.subr.bf16.mxu0 0
    %393 = vmatpush1.bf16.msra.mxu0 %v372
    %394 = vmatprep.subr.bf16.mxu0 0
    %395 = vmatpush1.bf16.msra.mxu0 %v373
    %396 = vmatprep.subr.bf16.mxu0 0
    %397 = vmatpush1.bf16.msra.mxu0 %v374
    %398 = vmatprep.subr.bf16.mxu0 0
    %399 = vmatpush1.bf16.msra.mxu0 %v375
    %400 = vmatprep.subr.bf16.mxu0 0
    %401 = vmatpush1.bf16.msra.mxu0 0
    %402 = vmatprep.subr.bf16.mxu0 0
    %403 = vmatpush1.bf16.msra.mxu0 0
    %404 = vmatprep.subr.bf16.mxu0 0
    %405 = vmatpush1.bf16.msra.mxu0 0
    %406 = vmatprep.subr.bf16.mxu0 0
    %407 = vmatpush1.bf16.msra.mxu0 0
    %408 = vmatprep.subr.bf16.mxu0 0
    %409 = vmatpush1.bf16.msra.mxu0 0
    %410 = vmatprep.subr.bf16.mxu0 0
    %411 = vmatpush1.bf16.msra.mxu0 0
    %412 = vmatprep.subr.bf16.mxu0 0
    %413 = vmatpush1.bf16.msra.mxu0 0
    %414 = vmatprep.subr.bf16.mxu0 0
    %415 = vmatpush1.bf16.msra.mxu0 0
    %416 = vmatprep.mubr.bf16.mxu0 0
    %417 = vmatmul.mubr.bf16.gmra.mrb[0].mxu0 %v312
    %v418 = vpop.f32.mrb[0].mxu0
    %v419 = vadd.f32 %v334, %v418
    %v420 = vpop.f32.mrb[0].mxu0
    %v421 = vpop.f32.mrb[0].mxu0
    %v422 = vpop.f32.mrb[0].mxu0
    %423 = vdwg.mxu0
    %424 = vst [vmem:[#allocation12] sm:$0xff] %v419
    // Predicated region
    $region46: #{tpu_custom_call.1} parent=1 // pred_check
      _
    $region47: #{tpu_custom_call.1} parent=1 // pred_check_branch
      %426 = sbr.rel (0) target = $region49
    $region48: #{tpu_custom_call.1} parent=1 // pred_region
      %s428 = ssub.s32 128, 128
      %429 = vsyncadd [#allocation6], %s428
      %s431 = sshll.u32 [#allocation12], 4
      %s432 = int_to_ptr.vmem [resolvable:$true] %s431
      %434 = dma.vmem_to_hbm [thread:$0]  %s432, 128, %s7, [#allocation6]
    $region49: #{tpu_custom_call.1} parent=1 // pred_fallthru
      _
    // Predicated region
    $region50: #{tpu_custom_call.1} parent=1 // pred_check
      _
    $region51: #{tpu_custom_call.1} parent=1 // pred_check_branch
      %436 = sbr.rel (0) target = $region53
    $region52: #{tpu_custom_call.1} parent=1 // pred_region
      %437 = dma.done [#allocation6], 128
    $region53: #{tpu_custom_call.1} parent=1 // pred_fallthru
      _
    %438 = vsyncpa [#allocation5], 1
    %439 = vsyncpa [#allocation8], 1
    %440 = vsyncpa [#allocation11], 1
    %441 = vsyncpa [#allocation6], 1

// kernel: tpu_custom_call.1
$region0: #{tpu_custom_call.1}
  #allocation0 [shape = 'u32[]', space=smem, size = 0x4, offset = 0x4, fixed_abs, tag = 'smem constant byte address 0x4 - core index']
  #allocation1 [shape = 'u32[144,128]{1,0:T(1,128)}', space=vmem, size = 0x12000, scoped, tag = 'internal scratch']
  #allocation2 [shape = 'f32[8,128]{1,0:T(8,128)}', space=vmem, size = 0x1000, scoped, tag = 'scratch operand']
  #allocation3 [shape = 'f32[8,128]{1,0:T(8,128)}', space=vmem, size = 0x1000, scoped, tag = 'scratch operand']
  %s0 = inlined_call_operand.hbm [shape: f32[8,128], index: 0, kind: input, shape index: {}]
  %s1 = inlined_call_operand.hbm [shape: bf16[128,128], index: 1, kind: input, shape index: {}]
  %s2 = inlined_call_operand.vmem [shape: f32[1,128], index: 2, kind: input, shape index: {}]
  %s3 = inlined_call_operand.hbm [shape: bf16[128,128], index: 3, kind: input, shape index: {}]
  %s4 = inlined_call_operand.vmem [shape: f32[1,128], index: 4, kind: input, shape index: {}]
  %s5 = inlined_call_operand.hbm [shape: bf16[128,128], index: 5, kind: input, shape index: {}]
  %s6 = inlined_call_operand.vmem [shape: f32[1,128], index: 6, kind: input, shape index: {}]
  %s7 = inlined_call_operand.hbm [shape: f32[8,128], index: 7, kind: output, shape index: {}]
  %s8 = sld [smem:[#allocation0]]
  $region54: #{tpu_custom_call.1} parent=0
    _
  %s10 = ssub.s32 1, %s8
  %s11 = scalar_select 0, %s10, %s8
  $region1: #{tpu_custom_call.1} parent=0
    #allocation4 [shape = 'u8[4096]{0}', space=vmem, size = 0x1000, scoped, tag = 'input window, operand 0, single buffered']
    #allocation5 [shape = 's32[1]{0}', space=sflag, size = 0x4, scoped, tag = 'scoped memory for tpu_custom_call.1']
    #allocation6 [shape = 's32[1]{0}', space=sflag, size = 0x4, scoped, tag = 'scoped memory for tpu_custom_call.1']
    #allocation7 [shape = 'u8[32768]{0}', space=vmem, size = 0x8000, scoped, tag = 'input window, operand 1, single buffered']
    #allocation8 [shape = 's32[1]{0}', space=sflag, size = 0x4, scoped, tag = 'scoped memory for tpu_custom_call.1']
    #allocation9 [shape = 'u8[32768]{0}', space=vmem, size = 0x8000, scoped, tag = 'input window, operand 3, single buffered']
    #allocation10 [shape = 'u8[32768]{0}', space=vmem, size = 0x8000, scoped, tag = 'input window, operand 5, single buffered']
    #allocation11 [shape = 's32[1]{0}', space=sflag, size = 0x4, scoped, tag = 'scoped memory for tpu_custom_call.1']
    #allocation12 [shape = 'u8[4096]{0}', space=vmem, size = 0x1000, scoped, tag = 'output window, operand 0, single buffered']
    %12 = vsyncpa [#allocation5], 0
    %13 = vsyncpa [#allocation8], 0
    %14 = vsyncpa [#allocation11], 0
    %15 = vsyncpa [#allocation6], 0
    // Predicated region
    $region2: #{tpu_custom_call.1} parent=1 // pred_check
      _
    $region3: #{tpu_custom_call.1} parent=1 // pred_check_branch
      %17 = sbr.rel (0) target = $region5
    $region4: #{tpu_custom_call.1} parent=1 // pred_region
      %s19 = ssub.s32 128, 128
      %20 = vsyncadd [#allocation5], %s19
      %s22 = sshll.u32 [#allocation4], 4
      %s23 = int_to_ptr.vmem [resolvable:$true] %s22
      %25 = dma.hbm_to_vmem [thread:$0]  %s0, 128, %s23, [#allocation5]
    $region5: #{tpu_custom_call.1} parent=1 // pred_fallthru
      _
    // Predicated region
    $region6: #{tpu_custom_call.1} parent=1 // pred_check
      _
    $region7: #{tpu_custom_call.1} parent=1 // pred_check_branch
      %27 = sbr.rel (0) target = $region9
    $region8: #{tpu_custom_call.1} parent=1 // pred_region
      %s29 = ssub.s32 1024, 1024
      %30 = vsyncadd [#allocation8], %s29
      %s31 = sshll.u32 [#allocation7], 4
      %s32 = int_to_ptr.vmem [resolvable:$true] %s31
      %37 = dma.hbm_to_vmem [thread:$0]  %s1, 1024, %s32, [#allocation8], 64, 64, 4
    $region9: #{tpu_custom_call.1} parent=1 // pred_fallthru
      _
    // Predicated region
    $region10: #{tpu_custom_call.1} parent=1 // pred_check
      _
    $region11: #{tpu_custom_call.1} parent=1 // pred_check_branch
      %39 = sbr.rel (0) target = $region13
    $region12: #{tpu_custom_call.1} parent=1 // pred_region
      _
    $region13: #{tpu_custom_call.1} parent=1 // pred_fallthru
      _
    // Predicated region
    $region14: #{tpu_custom_call.1} parent=1 // pred_check
      _
    $region15: #{tpu_custom_call.1} parent=1 // pred_check_branch
      %41 = sbr.rel (0) target = $region17
    $region16: #{tpu_custom_call.1} parent=1 // pred_region
      %s43 = ssub.s32 1024, 1024
      %44 = vsyncadd [#allocation8], %s43
      %s45 = sshll.u32 [#allocation9], 4
      %s46 = int_to_ptr.vmem [resolvable:$true] %s45
      %51 = dma.hbm_to_vmem [thread:$0]  %s3, 1024, %s46, [#allocation8], 64, 64, 4
    $region17: #{tpu_custom_call.1} parent=1 // pred_fallthru
      _
    // Predicated region
    $region18: #{tpu_custom_call.1} parent=1 // pred_check
      _
    $region19: #{tpu_custom_call.1} parent=1 // pred_check_branch
      %53 = sbr.rel (0) target = $region21
    $region20: #{tpu_custom_call.1} parent=1 // pred_region
      _
    $region21: #{tpu_custom_call.1} parent=1 // pred_fallthru
      _
    // Predicated region
    $region22: #{tpu_custom_call.1} parent=1 // pred_check
      _
    $region23: #{tpu_custom_call.1} parent=1 // pred_check_branch
      %55 = sbr.rel (0) target = $region25
    $region24: #{tpu_custom_call.1} parent=1 // pred_region
      %s57 = ssub.s32 1024, 1024
      %58 = vsyncadd [#allocation11], %s57
      %s59 = sshll.u32 [#allocation10], 4
      %s60 = int_to_ptr.vmem [resolvable:$true] %s59
      %65 = dma.hbm_to_vmem [thread:$0]  %s5, 1024, %s60, [#allocation11], 64, 64, 4
    $region25: #{tpu_custom_call.1} parent=1 // pred_fallthru
      _
    // Predicated region
    $region26: #{tpu_custom_call.1} parent=1 // pred_check
      _
    $region27: #{tpu_custom_call.1} parent=1 // pred_check_branch
      %67 = sbr.rel (0) target = $region29
    $region28: #{tpu_custom_call.1} parent=1 // pred_region
      _
    $region29: #{tpu_custom_call.1} parent=1 // pred_fallthru
      _
    // Predicated region
    $region30: #{tpu_custom_call.1} parent=1 // pred_check
      _
    $region31: #{tpu_custom_call.1} parent=1 // pred_check_branch
      %69 = sbr.rel (0) target = $region33
    $region32: #{tpu_custom_call.1} parent=1 // pred_region
      %70 = dma.done [#allocation5], 128
    $region33: #{tpu_custom_call.1} parent=1 // pred_fallthru
      _
    // Predicated region
    $region34: #{tpu_custom_call.1} parent=1 // pred_check
      _
    $region35: #{tpu_custom_call.1} parent=1 // pred_check_branch
      %72 = sbr.rel (0) target = $region37
    $region36: #{tpu_custom_call.1} parent=1 // pred_region
      %73 = dma.done [#allocation8], 1024
    $region37: #{tpu_custom_call.1} parent=1 // pred_fallthru
      _
    // Predicated region
    $region38: #{tpu_custom_call.1} parent=1 // pred_check
      _
    $region39: #{tpu_custom_call.1} parent=1 // pred_check_branch
      %75 = sbr.rel (0) target = $region41
    $region40: #{tpu_custom_call.1} parent=1 // pred_region
      %76 = dma.done [#allocation8], 1024
    $region41: #{tpu_custom_call.1} parent=1 // pred_fallthru
      _
    // Predicated region
    $region42: #{tpu_custom_call.1} parent=1 // pred_check
      _
    $region43: #{tpu_custom_call.1} parent=1 // pred_check_branch
      %78 = sbr.rel (0) target = $region45
    $region44: #{tpu_custom_call.1} parent=1 // pred_region
      %79 = dma.done [#allocation11], 1024
    $region45: #{tpu_custom_call.1} parent=1 // pred_fallthru
      _
    %v81 = vld [vmem:[#allocation4] sm:$0xff]
    %v82 = vpack.c.bf16 %v81, %v81
    %v83 = vld [vmem:[#allocation7] sm:$0xf]
    %v84 = vld [vmem:[#allocation7 + $0x4] sm:$0xf]
    %v85 = vld [vmem:[#allocation7 + $0x8] sm:$0xf]
    %v86 = vld [vmem:[#allocation7 + $0xc] sm:$0xf]
    %v87 = vld [vmem:[#allocation7 + $0x10] sm:$0xf]
    %v88 = vld [vmem:[#allocation7 + $0x14] sm:$0xf]
    %v89 = vld [vmem:[#allocation7 + $0x18] sm:$0xf]
    %v90 = vld [vmem:[#allocation7 + $0x1c] sm:$0xf]
    %v91 = vld [vmem:[#allocation7 + $0x20] sm:$0xf]
    %v92 = vld [vmem:[#allocation7 + $0x24] sm:$0xf]
    %v93 = vld [vmem:[#allocation7 + $0x28] sm:$0xf]
    %v94 = vld [vmem:[#allocation7 + $0x2c] sm:$0xf]
    %v95 = vld [vmem:[#allocation7 + $0x30] sm:$0xf]
    %v96 = vld [vmem:[#allocation7 + $0x34] sm:$0xf]
    %v97 = vld [vmem:[#allocation7 + $0x38] sm:$0xf]
    %v98 = vld [vmem:[#allocation7 + $0x3c] sm:$0xf]
    %v99 = vld [vmem:[%s2] sm:$0x1]
    %v101 = vlaneseq
    %v102 = vshrl.u32 %v101, 7
    %v103 = vsub.s32 0, %v102
    %v104 = vrot.slane %v99, %v103
    %v122 = vunpack.c.l.b16 %v83
    %v123 = vunpack.c.l.b16 %v84
    %v124 = vunpack.c.l.b16 %v85
    %v125 = vunpack.c.l.b16 %v86
    %v126 = vunpack.c.l.b16 %v87
    %v127 = vunpack.c.l.b16 %v88
    %v128 = vunpack.c.l.b16 %v89
    %v129 = vunpack.c.l.b16 %v90
    %v130 = vunpack.c.l.b16 %v91
    %v131 = vunpack.c.l.b16 %v92
    %v132 = vunpack.c.l.b16 %v93
    %v133 = vunpack.c.l.b16 %v94
    %v134 = vunpack.c.l.b16 %v95
    %v135 = vunpack.c.l.b16 %v96
    %v136 = vunpack.c.l.b16 %v97
    %v137 = vunpack.c.l.b16 %v98
    %v138 = vpack.c.b16 %v123, %v122
    %v139 = vpack.c.b16 %v125, %v124
    %v140 = vpack.c.b16 %v127, %v126
    %v141 = vpack.c.b16 %v129, %v128
    %v142 = vpack.c.b16 %v131, %v130
    %v143 = vpack.c.b16 %v133, %v132
    %v144 = vpack.c.b16 %v135, %v134
    %v145 = vpack.c.b16 %v137, %v136
    %154 = vmatprep.subr.bf16.mxu0 0
    %155 = vmatpush1.bf16.msra.mxu0 %v138
    %156 = vmatprep.subr.bf16.mxu0 0
    %157 = vmatpush1.bf16.msra.mxu0 %v139
    %158 = vmatprep.subr.bf16.mxu0 0
    %159 = vmatpush1.bf16.msra.mxu0 %v140
    %160 = vmatprep.subr.bf16.mxu0 0
    %161 = vmatpush1.bf16.msra.mxu0 %v141
    %162 = vmatprep.subr.bf16.mxu0 0
    %163 = vmatpush1.bf16.msra.mxu0 %v142
    %164 = vmatprep.subr.bf16.mxu0 0
    %165 = vmatpush1.bf16.msra.mxu0 %v143
    %166 = vmatprep.subr.bf16.mxu0 0
    %167 = vmatpush1.bf16.msra.mxu0 %v144
    %168 = vmatprep.subr.bf16.mxu0 0
    %169 = vmatpush1.bf16.msra.mxu0 %v145
    %170 = vmatprep.subr.bf16.mxu0 0
    %171 = vmatpush1.bf16.msra.mxu0 0
    %172 = vmatprep.subr.bf16.mxu0 0
    %173 = vmatpush1.bf16.msra.mxu0 0
    %174 = vmatprep.subr.bf16.mxu0 0
    %175 = vmatpush1.bf16.msra.mxu0 0
    %176 = vmatprep.subr.bf16.mxu0 0
    %177 = vmatpush1.bf16.msra.mxu0 0
    %178 = vmatprep.subr.bf16.mxu0 0
    %179 = vmatpush1.bf16.msra.mxu0 0
    %180 = vmatprep.subr.bf16.mxu0 0
    %181 = vmatpush1.bf16.msra.mxu0 0
    %182 = vmatprep.subr.bf16.mxu0 0
    %183 = vmatpush1.bf16.msra.mxu0 0
    %184 = vmatprep.subr.bf16.mxu0 0
    %185 = vmatpush1.bf16.msra.mxu0 0
    %186 = vmatprep.mubr.bf16.mxu0 0
    %187 = vmatmul.mubr.bf16.gmra.mrb[0].mxu0 %v82
    %v188 = vpop.f32.mrb[0].mxu0
    %v189 = vadd.f32 %v104, %v188
    %v190 = vpop.f32.mrb[0].mxu0
    %v191 = vpop.f32.mrb[0].mxu0
    %v192 = vpop.f32.mrb[0].mxu0
    %193 = vdwg.mxu0
    %v194 = vtanh.pop %v189
    %195 = vst [vmem:[#allocation2] sm:$0xff] %v194
    %v196 = vld [vmem:[#allocation2] sm:$0xff]
    %v197 = vpack.c.bf16 %v196, %v196
    %v198 = vld [vmem:[#allocation9] sm:$0xf]
    %v199 = vld [vmem:[#allocation9 + $0x4] sm:$0xf]
    %v200 = vld [vmem:[#allocation9 + $0x8] sm:$0xf]
    %v201 = vld [vmem:[#allocation9 + $0xc] sm:$0xf]
    %v202 = vld [vmem:[#allocation9 + $0x10] sm:$0xf]
    %v203 = vld [vmem:[#allocation9 + $0x14] sm:$0xf]
    %v204 = vld [vmem:[#allocation9 + $0x18] sm:$0xf]
    %v205 = vld [vmem:[#allocation9 + $0x1c] sm:$0xf]
    %v206 = vld [vmem:[#allocation9 + $0x20] sm:$0xf]
    %v207 = vld [vmem:[#allocation9 + $0x24] sm:$0xf]
    %v208 = vld [vmem:[#allocation9 + $0x28] sm:$0xf]
    %v209 = vld [vmem:[#allocation9 + $0x2c] sm:$0xf]
    %v210 = vld [vmem:[#allocation9 + $0x30] sm:$0xf]
    %v211 = vld [vmem:[#allocation9 + $0x34] sm:$0xf]
    %v212 = vld [vmem:[#allocation9 + $0x38] sm:$0xf]
    %v213 = vld [vmem:[#allocation9 + $0x3c] sm:$0xf]
    %v214 = vld [vmem:[%s4] sm:$0x1]
    %v216 = vlaneseq
    %v217 = vshrl.u32 %v216, 7
    %v218 = vsub.s32 0, %v217
    %v219 = vrot.slane %v214, %v218
    %v237 = vunpack.c.l.b16 %v198
    %v238 = vunpack.c.l.b16 %v199
    %v239 = vunpack.c.l.b16 %v200
    %v240 = vunpack.c.l.b16 %v201
    %v241 = vunpack.c.l.b16 %v202
    %v242 = vunpack.c.l.b16 %v203
    %v243 = vunpack.c.l.b16 %v204
    %v244 = vunpack.c.l.b16 %v205
    %v245 = vunpack.c.l.b16 %v206
    %v246 = vunpack.c.l.b16 %v207
    %v247 = vunpack.c.l.b16 %v208
    %v248 = vunpack.c.l.b16 %v209
    %v249 = vunpack.c.l.b16 %v210
    %v250 = vunpack.c.l.b16 %v211
    %v251 = vunpack.c.l.b16 %v212
    %v252 = vunpack.c.l.b16 %v213
    %v253 = vpack.c.b16 %v238, %v237
    %v254 = vpack.c.b16 %v240, %v239
    %v255 = vpack.c.b16 %v242, %v241
    %v256 = vpack.c.b16 %v244, %v243
    %v257 = vpack.c.b16 %v246, %v245
    %v258 = vpack.c.b16 %v248, %v247
    %v259 = vpack.c.b16 %v250, %v249
    %v260 = vpack.c.b16 %v252, %v251
    %269 = vmatprep.subr.bf16.mxu0 0
    %270 = vmatpush1.bf16.msra.mxu0 %v253
    %271 = vmatprep.subr.bf16.mxu0 0
    %272 = vmatpush1.bf16.msra.mxu0 %v254
    %273 = vmatprep.subr.bf16.mxu0 0
    %274 = vmatpush1.bf16.msra.mxu0 %v255
    %275 = vmatprep.subr.bf16.mxu0 0
    %276 = vmatpush1.bf16.msra.mxu0 %v256
    %277 = vmatprep.subr.bf16.mxu0 0
    %278 = vmatpush1.bf16.msra.mxu0 %v257
    %279 = vmatprep.subr.bf16.mxu0 0
    %280 = vmatpush1.bf16.msra.mxu0 %v258
    %281 = vmatprep.subr.bf16.mxu0 0
    %282 = vmatpush1.bf16.msra.mxu0 %v259
    %283 = vmatprep.subr.bf16.mxu0 0
    %284 = vmatpush1.bf16.msra.mxu0 %v260
    %285 = vmatprep.subr.bf16.mxu0 0
    %286 = vmatpush1.bf16.msra.mxu0 0
    %287 = vmatprep.subr.bf16.mxu0 0
    %288 = vmatpush1.bf16.msra.mxu0 0
    %289 = vmatprep.subr.bf16.mxu0 0
    %290 = vmatpush1.bf16.msra.mxu0 0
    %291 = vmatprep.subr.bf16.mxu0 0
    %292 = vmatpush1.bf16.msra.mxu0 0
    %293 = vmatprep.subr.bf16.mxu0 0
    %294 = vmatpush1.bf16.msra.mxu0 0
    %295 = vmatprep.subr.bf16.mxu0 0
    %296 = vmatpush1.bf16.msra.mxu0 0
    %297 = vmatprep.subr.bf16.mxu0 0
    %298 = vmatpush1.bf16.msra.mxu0 0
    %299 = vmatprep.subr.bf16.mxu0 0
    %300 = vmatpush1.bf16.msra.mxu0 0
    %301 = vmatprep.mubr.bf16.mxu0 0
    %302 = vmatmul.mubr.bf16.gmra.mrb[0].mxu0 %v197
    %v303 = vpop.f32.mrb[0].mxu0
    %v304 = vadd.f32 %v219, %v303
    %v305 = vpop.f32.mrb[0].mxu0
    %v306 = vpop.f32.mrb[0].mxu0
    %v307 = vpop.f32.mrb[0].mxu0
    %308 = vdwg.mxu0
    %v309 = vtanh.pop %v304
    %310 = vst [vmem:[#allocation3] sm:$0xff] %v309
    %v311 = vld [vmem:[#allocation3] sm:$0xff]
    %v312 = vpack.c.bf16 %v311, %v311
    %v313 = vld [vmem:[#allocation10] sm:$0xf]
    %v314 = vld [vmem:[#allocation10 + $0x4] sm:$0xf]
    %v315 = vld [vmem:[#allocation10 + $0x8] sm:$0xf]
    %v316 = vld [vmem:[#allocation10 + $0xc] sm:$0xf]
    %v317 = vld [vmem:[#allocation10 + $0x10] sm:$0xf]
    %v318 = vld [vmem:[#allocation10 + $0x14] sm:$0xf]
    %v319 = vld [vmem:[#allocation10 + $0x18] sm:$0xf]
    %v320 = vld [vmem:[#allocation10 + $0x1c] sm:$0xf]
    %v321 = vld [vmem:[#allocation10 + $0x20] sm:$0xf]
    %v322 = vld [vmem:[#allocation10 + $0x24] sm:$0xf]
    %v323 = vld [vmem:[#allocation10 + $0x28] sm:$0xf]
    %v324 = vld [vmem:[#allocation10 + $0x2c] sm:$0xf]
    %v325 = vld [vmem:[#allocation10 + $0x30] sm:$0xf]
    %v326 = vld [vmem:[#allocation10 + $0x34] sm:$0xf]
    %v327 = vld [vmem:[#allocation10 + $0x38] sm:$0xf]
    %v328 = vld [vmem:[#allocation10 + $0x3c] sm:$0xf]
    %v329 = vld [vmem:[%s6] sm:$0x1]
    %v331 = vlaneseq
    %v332 = vshrl.u32 %v331, 7
    %v333 = vsub.s32 0, %v332
    %v334 = vrot.slane %v329, %v333
    %v352 = vunpack.c.l.b16 %v313
    %v353 = vunpack.c.l.b16 %v314
    %v354 = vunpack.c.l.b16 %v315
    %v355 = vunpack.c.l.b16 %v316
    %v356 = vunpack.c.l.b16 %v317
    %v357 = vunpack.c.l.b16 %v318
    %v358 = vunpack.c.l.b16 %v319
    %v359 = vunpack.c.l.b16 %v320
    %v360 = vunpack.c.l.b16 %v321
    %v361 = vunpack.c.l.b16 %v322
    %v362 = vunpack.c.l.b16 %v323
    %v363 = vunpack.c.l.b16 %v324
    %v364 = vunpack.c.l.b16 %v325
    %v365 = vunpack.c.l.b16 %v326
    %v366 = vunpack.c.l.b16 %v327
    %v367 = vunpack.c.l.b16 %v328
    %v368 = vpack.c.b16 %v353, %v352
    %v369 = vpack.c.b16 %v355, %v354
    %v370 = vpack.c.b16 %v357, %v356
    %v371 = vpack.c.b16 %v359, %v358
    %v372 = vpack.c.b16 %v361, %v360
    %v373 = vpack.c.b16 %v363, %v362
    %v374 = vpack.c.b16 %v365, %v364
    %v375 = vpack.c.b16 %v367, %v366
    %384 = vmatprep.subr.bf16.mxu0 0
    %385 = vmatpush1.bf16.msra.mxu0 %v368
    %386 = vmatprep.subr.bf16.mxu0 0
    %387 = vmatpush1.bf16.msra.mxu0 %v369
    %388 = vmatprep.subr.bf16.mxu0 0
    %389 = vmatpush1.bf16.msra.mxu0 %v370
    %390 = vmatprep.subr.bf16.mxu0 0
    %391 = vmatpush1.bf16.msra.mxu0 %v371
    %392 = vmatprep.subr.bf16.mxu0 0
    %393 = vmatpush1.bf16.msra.mxu0 %v372
    %394 = vmatprep.subr.bf16.mxu0 0
    %395 = vmatpush1.bf16.msra.mxu0 %v373
    %396 = vmatprep.subr.bf16.mxu0 0
    %397 = vmatpush1.bf16.msra.mxu0 %v374
    %398 = vmatprep.subr.bf16.mxu0 0
    %399 = vmatpush1.bf16.msra.mxu0 %v375
    %400 = vmatprep.subr.bf16.mxu0 0
    %401 = vmatpush1.bf16.msra.mxu0 0
    %402 = vmatprep.subr.bf16.mxu0 0
    %403 = vmatpush1.bf16.msra.mxu0 0
    %404 = vmatprep.subr.bf16.mxu0 0
    %405 = vmatpush1.bf16.msra.mxu0 0
    %406 = vmatprep.subr.bf16.mxu0 0
    %407 = vmatpush1.bf16.msra.mxu0 0
    %408 = vmatprep.subr.bf16.mxu0 0
    %409 = vmatpush1.bf16.msra.mxu0 0
    %410 = vmatprep.subr.bf16.mxu0 0
    %411 = vmatpush1.bf16.msra.mxu0 0
    %412 = vmatprep.subr.bf16.mxu0 0
    %413 = vmatpush1.bf16.msra.mxu0 0
    %414 = vmatprep.subr.bf16.mxu0 0
    %415 = vmatpush1.bf16.msra.mxu0 0
    %416 = vmatprep.mubr.bf16.mxu0 0
    %417 = vmatmul.mubr.bf16.gmra.mrb[0].mxu0 %v312
    %v418 = vpop.f32.mrb[0].mxu0
    %v419 = vadd.f32 %v334, %v418
    %v420 = vpop.f32.mrb[0].mxu0
    %v421 = vpop.f32.mrb[0].mxu0
    %v422 = vpop.f32.mrb[0].mxu0
    %423 = vdwg.mxu0
    %424 = vst [vmem:[#allocation12] sm:$0xff] %v419
    // Predicated region
    $region46: #{tpu_custom_call.1} parent=1 // pred_check
      _
    $region47: #{tpu_custom_call.1} parent=1 // pred_check_branch
      %426 = sbr.rel (0) target = $region49
    $region48: #{tpu_custom_call.1} parent=1 // pred_region
      %s428 = ssub.s32 128, 128
      %429 = vsyncadd [#allocation6], %s428
      %s431 = sshll.u32 [#allocation12], 4
      %s432 = int_to_ptr.vmem [resolvable:$true] %s431
      %434 = dma.vmem_to_hbm [thread:$0]  %s432, 128, %s7, [#allocation6]
    $region49: #{tpu_custom_call.1} parent=1 // pred_fallthru
      _
    // Predicated region
    $region50: #{tpu_custom_call.1} parent=1 // pred_check
      _
    $region51: #{tpu_custom_call.1} parent=1 // pred_check_branch
      %436 = sbr.rel (0) target = $region53
    $region52: #{tpu_custom_call.1} parent=1 // pred_region
      %437 = dma.done [#allocation6], 128
    $region53: #{tpu_custom_call.1} parent=1 // pred_fallthru
      _
    %438 = vsyncpa [#allocation5], 1
    %439 = vsyncpa [#allocation8], 1
    %440 = vsyncpa [#allocation11], 1
    %441 = vsyncpa [#allocation6], 1

</llo_original>
